<compile_context>
chip_gen: v5e
topology: v5e:2x2
jax: 0.10.0
libtpu: 0.0.40
codegen_flags: <defaults>
</compile_context>

<pallas_src>
import functools

import jax
import jax.numpy as jnp
import numpy as np
from jax.experimental import pallas as pl
from jax.experimental.pallas import tpu as pltpu

_EPS = 1e-5
_LANE = 128
_BLOCK_BUDGET_BYTES = 4 * 1024 * 1024   # target bytes per input row-block
_MIN_BLOCK_BYTES = 512 * 1024           # never shrink blocks below this
_VMEM_LIMIT_BYTES = 48 * 1024 * 1024    # < 64 MiB physical VMEM on v7x


def _layernorm_kernel(x_ref, w_ref, b_ref, o_ref, *, d, padded):
    # x_ref: (bm, d_pad) tile; w_ref / b_ref: (1, d_pad) resident f32 params.
    x = x_ref[...].astype(jnp.float32)
    w = w_ref[...]                       # already f32 (cast once in wrapper)
    b = b_ref[...]

    inv_d = jnp.float32(1.0 / d)         # divide by the TRUE feature count
    mean = jnp.sum(x, axis=-1, keepdims=True) * inv_d   # zero-padding is inert

    xc = x - mean
    if padded:
        # Padded lanes hold 0 in x, so (0 - mean) must be masked out of the
        # variance; output on those lanes is sliced away in the wrapper.
        lane = jax.lax.broadcasted_iota(jnp.int32, x.shape, x.ndim - 1)
        xc = jnp.where(lane < d, xc, 0.0)

    var = jnp.sum(xc * xc, axis=-1, keepdims=True) * inv_d   # biased variance
    inv = jax.lax.rsqrt(var + _EPS)                           # EUP rsqrt
    o_ref[...] = ((xc * inv) * w + b).astype(o_ref.dtype)


def _pick_block_rows(n_rows, d_pad, itemsize):
    # Sublane pack of the IO dtype: 8 rows f32, 16 bf16, 32 int8/fp8.
    pack = max(8, 32 // max(1, itemsize))
    row_bytes = max(1, d_pad * itemsize)

    bm = max(pack, _BLOCK_BUDGET_BYTES // row_bytes)
    # Keep >= ~8 grid steps when the problem is big enough (feeds both v7x
    # TensorCores and the double-buffered DMA pipeline), but never drop below
    # ~512 KiB blocks (per-step overhead would start to dominate).
    min_bm = max(pack, _MIN_BLOCK_BYTES // row_bytes)
    target = -(-n_rows // 8)
    if bm > target:
        bm = max(min_bm, target)

    bm = max(pack, (bm // pack) * pack)
    if bm >= n_rows:
        return n_rows                     # block == full extent (always legal)
    return bm                             # ragged last block handled by Pallas


@functools.partial(jax.jit, static_argnames=("block_rows",))
def withbias_layernorm(x, weight, bias, block_rows=None):
    """LayerNorm over the last dim of x; weight / bias have shape (D,)."""
    orig_shape = x.shape
    d = orig_shape[-1]
    n_rows = int(np.prod(orig_shape[:-1]))

    # Lane-dense layout: pad D up to a multiple of 128 so loads/stores are
    # unmasked full-lane ops; reductions divide by the true D.
    d_pad = -(-d // _LANE) * _LANE
    padded = d_pad != d

    x2 = x.reshape(n_rows, d)
    w2 = weight.reshape(1, d).astype(jnp.float32)
    b2 = bias.reshape(1, d).astype(jnp.float32)
    if padded:
        x2 = jnp.pad(x2, ((0, 0), (0, d_pad - d)))
        w2 = jnp.pad(w2, ((0, 0), (0, d_pad - d)))
        b2 = jnp.pad(b2, ((0, 0), (0, d_pad - d)))

    bm = block_rows if block_rows is not None else _pick_block_rows(
        n_rows, d_pad, x.dtype.itemsize)
    grid = (pl.cdiv(n_rows, bm),)

    itemsize = x.dtype.itemsize
    cost = pl.CostEstimate(
        flops=8 * n_rows * d,
        transcendentals=n_rows,
        bytes_accessed=2 * n_rows * d_pad * itemsize + 2 * d_pad * 4,
    )

    kernel = functools.partial(_layernorm_kernel, d=d, padded=padded)

    out = pl.pallas_call(
        kernel,
        out_shape=jax.ShapeDtypeStruct((n_rows, d_pad), x.dtype),
        grid_spec=pltpu.PrefetchScalarGridSpec(
            num_scalar_prefetch=0,
            grid=grid,
            in_specs=[
                pl.BlockSpec((bm, d_pad), lambda i: (i, 0)),   # x row-block
                pl.BlockSpec((1, d_pad), lambda i: (0, 0)),    # weight (resident)
                pl.BlockSpec((1, d_pad), lambda i: (0, 0)),    # bias   (resident)
            ],
            out_specs=pl.BlockSpec((bm, d_pad), lambda i: (i, 0)),
        ),
        compiler_params=pltpu.CompilerParams(
            dimension_semantics=("parallel",),
            vmem_limit_bytes=_VMEM_LIMIT_BYTES,
        ),
        cost_estimate=cost,
    )(x2, w2, b2)

    if padded:
        out = out[:, :d]
    return out.reshape(orig_shape)


def layernorm_ref(x, weight, bias, eps=_EPS):
    """Pure-JAX reference mirroring the PyTorch forward."""
    mu = jnp.mean(x, axis=-1, keepdims=True)
    var = jnp.mean((x - mu) ** 2, axis=-1, keepdims=True)   # unbiased=False
    return (x - mu) / jnp.sqrt(var + eps) * weight + bias


if __name__ == "__main__":
    key = jax.random.PRNGKey(0)
    k_x, k_w, k_b, k_x2 = jax.random.split(key, 4)

    # Shapes implied by the module: (..., D) normalized over the last dim D.
    B, S, D = 2, 8, 32
    x = jax.random.normal(k_x, (B, S, D), jnp.float32)
    # Module initializes weight=1, bias=0; perturb so the affine path is
    # actually exercised.
    weight = 1.0 + 0.1 * jax.random.normal(k_w, (D,), jnp.float32)
    bias = 0.1 * jax.random.normal(k_b, (D,), jnp.float32)

    out = withbias_layernorm(x, weight, bias)
    jax.block_until_ready(out)
    ref = layernorm_ref(x, weight, bias)
    assert out.shape == x.shape
    assert jnp.allclose(out, ref, atol=1e-4, rtol=1e-4), \
        float(jnp.max(jnp.abs(out - ref)))

    # Second check: lane-dense D=128 with a forced small row block to exercise
    # the multi-block grid / double-buffered pipeline / ragged-free path.
    B2, S2, D2 = 2, 64, 128
    xb = jax.random.normal(k_x2, (B2, S2, D2), jnp.float32)
    wb = 1.0 + 0.05 * jax.random.normal(k_w, (D2,), jnp.float32)
    bb = 0.05 * jax.random.normal(k_b, (D2,), jnp.float32)
    out2 = withbias_layernorm(xb, wb, bb, block_rows=8)
    jax.block_until_ready(out2)
    ref2 = layernorm_ref(xb, wb, bb)
    assert jnp.allclose(out2, ref2, atol=1e-4, rtol=1e-4), \
        float(jnp.max(jnp.abs(out2 - ref2)))

    print("KERNEL_OK")
</pallas_src>

<mosaic_0001>
module attributes {stable_mosaic.version = 11 : i64} {
  func.func @_layernorm_kernel(%arg0: i32, %arg1: memref<16x128xf32, #tpu.memory_space<vmem>>, %arg2: memref<1x128xf32, #tpu.memory_space<vmem>>, %arg3: memref<1x128xf32, #tpu.memory_space<vmem>>, %arg4: memref<16x128xf32, #tpu.memory_space<vmem>>) attributes {dimension_semantics = [#tpu.dimension_semantics<parallel>], iteration_bounds = array<i64: 1>, scalar_prefetch = 0 : i64, scratch_operands = 0 : i64, tpu.core_type = #tpu.core_type<tc>, window_params = [{transform_indices = @transform_0, window_bounds = array<i64: 16, 128>}, {pipeline_mode = #tpu.pipeline_mode<synchronous>, transform_indices = @transform_1, window_bounds = array<i64: 1, 128>}, {pipeline_mode = #tpu.pipeline_mode<synchronous>, transform_indices = @transform_2, window_bounds = array<i64: 1, 128>}, {transform_indices = @transform_3, window_bounds = array<i64: 16, 128>}]} {
    %c0 = arith.constant 0 : index
    %c0_0 = arith.constant 0 : index
    %0 = vector.load %arg1[%c0, %c0_0] : memref<16x128xf32, #tpu.memory_space<vmem>>, vector<16x128xf32>
    %c0_1 = arith.constant 0 : index
    %c0_2 = arith.constant 0 : index
    %1 = vector.load %arg2[%c0_1, %c0_2] : memref<1x128xf32, #tpu.memory_space<vmem>>, vector<1x128xf32>
    %c0_3 = arith.constant 0 : index
    %c0_4 = arith.constant 0 : index
    %2 = vector.load %arg3[%c0_3, %c0_4] : memref<1x128xf32, #tpu.memory_space<vmem>>, vector<1x128xf32>
    %cst = arith.constant dense<0.000000e+00> : vector<16xf32>
    %3 = vector.multi_reduction <add>, %0, %cst [1] : vector<16x128xf32> to vector<16xf32>
    %4 = vector.shape_cast %3 : vector<16xf32> to vector<16x1xf32>
    %cst_5 = arith.constant 3.125000e-02 : f32
    %5 = vector.broadcast %cst_5 : f32 to vector<16x1xf32>
    %6 = arith.mulf %4, %5 : vector<16x1xf32>
    %7 = vector.broadcast %6 : vector<16x1xf32> to vector<16x128xf32>
    %8 = arith.subf %0, %7 : vector<16x128xf32>
    %9 = tpu.iota {dimensions = array<i32: 1>} : vector<16x128xi32>
    %c32_i32 = arith.constant 32 : i32
    %10 = vector.broadcast %c32_i32 : i32 to vector<16x128xi32>
    %11 = arith.cmpi slt, %9, %10 : vector<16x128xi32>
    %cst_6 = arith.constant 0.000000e+00 : f32
    %12 = vector.broadcast %cst_6 : f32 to vector<16x128xf32>
    %13 = arith.select %11, %8, %12 : vector<16x128xi1>, vector<16x128xf32>
    %14 = arith.mulf %13, %13 : vector<16x128xf32>
    %cst_7 = arith.constant dense<0.000000e+00> : vector<16xf32>
    %15 = vector.multi_reduction <add>, %14, %cst_7 [1] : vector<16x128xf32> to vector<16xf32>
    %16 = vector.shape_cast %15 : vector<16xf32> to vector<16x1xf32>
    %cst_8 = arith.constant 3.125000e-02 : f32
    %17 = vector.broadcast %cst_8 : f32 to vector<16x1xf32>
    %18 = arith.mulf %16, %17 : vector<16x1xf32>
    %cst_9 = arith.constant 9.99999974E-6 : f32
    %19 = vector.broadcast %cst_9 : f32 to vector<16x1xf32>
    %20 = arith.addf %18, %19 : vector<16x1xf32>
    %21 = math.rsqrt %20 : vector<16x1xf32>
    %22 = vector.broadcast %21 : vector<16x1xf32> to vector<16x128xf32>
    %23 = arith.mulf %13, %22 : vector<16x128xf32>
    %24 = vector.broadcast %1 : vector<1x128xf32> to vector<16x128xf32>
    %25 = arith.mulf %23, %24 : vector<16x128xf32>
    %26 = vector.broadcast %2 : vector<1x128xf32> to vector<16x128xf32>
    %27 = arith.addf %25, %26 : vector<16x128xf32>
    %c0_10 = arith.constant 0 : index
    %c0_11 = arith.constant 0 : index
    %28 = vector.load %arg4[%c0_10, %c0_11] : memref<16x128xf32, #tpu.memory_space<vmem>>, vector<16x128xf32>
    tpu.vector_store %arg4[%c0_10, %c0_11], %27 {strides = array<i32>} : memref<16x128xf32, #tpu.memory_space<vmem>>, vector<16x128xf32>,
    return
  }
  func.func @transform_0(%arg0: i32) -> (i32, i32) {
    %c0_i32 = arith.constant 0 : i32
    %c0_i32_0 = arith.constant 0 : i32
    return %arg0, %c0_i32 : i32, i32
  }
  func.func @transform_1(%arg0: i32) -> (i32, i32) {
    %c0_i32 = arith.constant 0 : i32
    %c0_i32_0 = arith.constant 0 : i32
    %c0_i32_1 = arith.constant 0 : i32
    return %c0_i32, %c0_i32_0 : i32, i32
  }
  func.func @transform_2(%arg0: i32) -> (i32, i32) {
    %c0_i32 = arith.constant 0 : i32
    %c0_i32_0 = arith.constant 0 : i32
    %c0_i32_1 = arith.constant 0 : i32
    return %c0_i32, %c0_i32_0 : i32, i32
  }
  func.func @transform_3(%arg0: i32) -> (i32, i32) {
    %c0_i32 = arith.constant 0 : i32
    %c0_i32_0 = arith.constant 0 : i32
    return %arg0, %c0_i32 : i32, i32
  }
}

</mosaic_0001>

<llo_original>
// kernel: withbias_layernorm.1
$region0: #{withbias_layernorm.1}
  #allocation0 [shape = 'u32[]', space=smem, size = 0x4, offset = 0x4, fixed_abs, tag = 'smem constant byte address 0x4 - core index']
  #allocation1 [shape = 'u32[72,128]{1,0:T(1,128)}', space=vmem, size = 0x9000, scoped, tag = 'internal scratch']
  %s0 = inlined_call_operand.vmem [shape: f32[16,128], index: 0, kind: input, shape index: {}]
  %s1 = inlined_call_operand.vmem [shape: f32[1,128], index: 1, kind: input, shape index: {}]
  %s2 = inlined_call_operand.vmem [shape: f32[1,128], index: 2, kind: input, shape index: {}]
  %s3 = inlined_call_operand.vmem [shape: f32[16,128], index: 3, kind: output, shape index: {}]
  %s4 = sld [smem:[#allocation0]]
  $region22: #{withbias_layernorm.1} parent=0
    _
  %s6 = ssub.s32 1, %s4
  %s7 = scalar_select 0, %s6, %s4
  // Predicated region
  $region2: #{withbias_layernorm.1} parent=0 // pred_check
    _
  $region3: #{withbias_layernorm.1} parent=0 // pred_check_branch
    %9 = sbr.rel (0) target = $region5
  $region4: #{withbias_layernorm.1} parent=0 // pred_region
    _
  $region5: #{withbias_layernorm.1} parent=0 // pred_fallthru
    _
  // Predicated region
  $region6: #{withbias_layernorm.1} parent=0 // pred_check
    _
  $region7: #{withbias_layernorm.1} parent=0 // pred_check_branch
    %11 = sbr.rel (0) target = $region9
  $region8: #{withbias_layernorm.1} parent=0 // pred_region
    _
  $region9: #{withbias_layernorm.1} parent=0 // pred_fallthru
    _
  // Predicated region
  $region10: #{withbias_layernorm.1} parent=0 // pred_check
    _
  $region11: #{withbias_layernorm.1} parent=0 // pred_check_branch
    %13 = sbr.rel (0) target = $region13
  $region12: #{withbias_layernorm.1} parent=0 // pred_region
    _
  $region13: #{withbias_layernorm.1} parent=0 // pred_fallthru
    _
  %v14 = vld [vmem:[%s0] sm:$0xff]
  %v15 = vld [vmem:[%s0 + $0x8] sm:$0xff]
  %v16 = vld [vmem:[%s1] sm:$0x1]
  %v17 = vld [vmem:[%s2] sm:$0x1]
  %18 = vadd.xlane.f32.xlu0 %v14
  %v19 = vpop.xlane.xlu0 %18
  %20 = vadd.xlane.f32.xlu0 %v15
  %v21 = vpop.xlane.xlu0 %20
  %v22 = vmul.f32 %v19, 0.03125
  %v23 = vmul.f32 %v21, 0.03125
  %v24 = vsub.f32 %v14, %v22
  %v25 = vsub.f32 %v15, %v23
  %v26 = vlaneseq
  %v27 = vand.u32 %v26, 127
  %vm28 = vcmp.lt.s32.totalorder %v27, 32
  %v29 = vsel %vm28, %v24, 0.0
  %v30 = vsel %vm28, %v25, 0.0
  %v31 = vmul.f32 %v29, %v29
  %v32 = vmul.f32 %v30, %v30
  %33 = vadd.xlane.f32.xlu0 %v31
  %v34 = vpop.xlane.xlu0 %33
  %35 = vadd.xlane.f32.xlu0 %v32
  %v36 = vpop.xlane.xlu0 %35
  %v37 = vmul.f32 %v34, 0.03125
  %v38 = vmul.f32 %v36, 0.03125
  %v39 = vadd.f32 %v37, 1e-05
  %v40 = vadd.f32 %v38, 1e-05
  %v41 = vrsqrt.pop %v39
  %v42 = vmul.f32 %v41, %v39
  %v43 = vmul.f32 %v42, %v41
  %v44 = vmul.f32 0.5, %v43
  %v45 = vsub.f32 1.5, %v44
  %v46 = vmul.f32 %v41, %v45
  %vm47 = vweird.f32 %v39
  %vm48 = vweird.f32 %v41
  %vm49 = vmor %vm47, %vm48
  %v50 = vsel %vm49, %v41, %v46
  %v51 = vrsqrt.pop %v40
  %v52 = vmul.f32 %v51, %v40
  %v53 = vmul.f32 %v52, %v51
  %v54 = vmul.f32 0.5, %v53
  %v55 = vsub.f32 1.5, %v54
  %v56 = vmul.f32 %v51, %v55
  %vm57 = vweird.f32 %v40
  %vm58 = vweird.f32 %v51
  %vm59 = vmor %vm57, %vm58
  %v60 = vsel %vm59, %v51, %v56
  %v61 = vmul.f32 %v29, %v50
  %v62 = vmul.f32 %v30, %v60
  %v64 = vperm.slane %v16, 0
  %v66 = vmul.f32 %v61, %v64
  %v67 = vmul.f32 %v62, %v64
  %v69 = vperm.slane %v17, 0
  %v71 = vadd.f32 %v66, %v69
  %v72 = vadd.f32 %v67, %v69
  %73 = vst [vmem:[%s3] sm:$0xff] %v71
  %74 = vst [vmem:[%s3 + $0x8] sm:$0xff] %v72
  // Predicated region
  $region14: #{withbias_layernorm.1} parent=0 // pred_check
    _
  $region15: #{withbias_layernorm.1} parent=0 // pred_check_branch
    %76 = sbr.rel (0) target = $region17
  $region16: #{withbias_layernorm.1} parent=0 // pred_region
    _
  $region17: #{withbias_layernorm.1} parent=0 // pred_fallthru
    _
  // Predicated region
  $region18: #{withbias_layernorm.1} parent=0 // pred_check
    _
  $region19: #{withbias_layernorm.1} parent=0 // pred_check_branch
    %78 = sbr.rel (0) target = $region21
  $region20: #{withbias_layernorm.1} parent=0 // pred_region
    _
  $region21: #{withbias_layernorm.1} parent=0 // pred_fallthru
    _

</llo_original>
